<compile_context>
chip_gen: v7x
topology: tpu7x:2x2x1
jax: 0.10.0
libtpu: 0.0.40
codegen_flags: <defaults>
</compile_context>

<pallas_src>
import math

import jax
import jax.numpy as jnp
from jax.experimental import pallas as pl
from jax.experimental.pallas import tpu as pltpu


def _smha_kernel(x_ref, w_ref, b_ref, out_ref):
    # x_ref:   (tm, L) f32  row-tile of lane-packed input (P original rows/row)
    # w_ref:   (L, L)  bf16 block-diagonal weight, pre-scaled by U[head]/d and
    #                       column-permuted to (d_k, head) order
    # b_ref:   (1, L)  f32  tiled, pre-scaled, column-permuted bias
    # out_ref: (tm, L) f32  packed attention scores
    x = x_ref[...].astype(jnp.bfloat16)            # in-kernel cast (VPU, free)
    h = jnp.dot(x, w_ref[...], preferred_element_type=jnp.float32)
    out_ref[...] = jnp.exp(h + b_ref[...])         # f32 epilogue (v5e-safe)


def _pack_factor(D):
    """Original rows lane-packed per kernel row.

    Targets a lane-dense / MXU-wide last dim: 128 on v5-class and earlier
    chips, 256 on v6e / v7x (their MXUs are 256 wide).
    """
    try:
        kind = jax.devices()[0].device_kind.lower()
    except Exception:  # conservative fallback
        kind = ""
    target = 128 if any(v in kind for v in ("v2", "v3", "v4", "v5")) else 256
    if D >= target or target % D != 0:
        return 1
    return target // D


def _choose_row_tile(rows, lane_width):
    """Packed-row tile per grid step.

    Single grid step for small problems (the ~0.35us per-step overhead
    dominates at this arithmetic intensity); split only once each step still
    carries >= ~128K elements (when a v7x 2-TC split starts to pay); cap at
    2048 packed rows (~2 MiB per f32 buffer, well under VMEM everywhere).
    """
    cap = 2048
    if rows <= 16 or rows * lane_width < 2 * 128 * 1024:
        return rows                        # one step; block == full dim is legal
    half = -(-rows // 2)
    return min(cap, -(-half // 8) * 8)     # >= 2 steps, sublane-multiple tile


def smha_pooling(x, weight, bias, u, heads):
    """x: (bs, seq, D); weight: (D, D) PyTorch (out,in); bias: (D,); u: (K,)."""
    bs, seq, D = x.shape
    K = heads
    d_k = D // K
    d = int(math.sqrt(d_k))  # matches int(numpy.sqrt(d_k)) in the module

    # Column permutation: new column j = p*K + k  <-  old column k*d_k + p,
    # so out.reshape(bs, seq, d_k, K) is already the final layout.
    cols = jnp.arange(D).reshape(K, d_k).T.reshape(-1)
    # Per-(new)column multiplier: column p*K + k gets u[k] / d.
    scale = (jnp.tile(u, d_k) / float(d)).astype(jnp.float32)            # (D,)

    # Fold the scale into weight and bias: exp((xW+b)*s) == exp(x(W*s) + b*s).
    w_scaled = (weight.T[:, cols] * scale[None, :]).astype(jnp.float32)  # (D, D)
    b_scaled = (bias[cols] * scale).astype(jnp.float32)                  # (D,)

    # Lane packing: P original rows per kernel row -> last dim L = P*D.
    P = _pack_factor(D)
    L = P * D
    M = bs * seq
    Mr = pl.cdiv(M, P) * P
    xf = x.reshape(M, D)
    if Mr != M:                       # never taken for the shipped shapes
        xf = jnp.pad(xf, ((0, Mr - M), (0, 0)))
    rows = Mr // P
    xf = xf.reshape(rows, L)          # pure reshape; x stays f32 (cast in-kernel)

    # Block-diagonal packed weight (bf16 MXU operand) and tiled bias (f32).
    w_packed = jnp.kron(jnp.eye(P, dtype=jnp.float32), w_scaled).astype(jnp.bfloat16)
    b_packed = jnp.tile(b_scaled, P).reshape(1, L)

    tm = _choose_row_tile(rows, L)
    rows_p = pl.cdiv(rows, tm) * tm
    if rows_p != rows:                # rare ragged tail; not taken when rows <= tile
        xf = jnp.pad(xf, ((0, rows_p - rows), (0, 0)))

    out = pl.pallas_call(
        _smha_kernel,
        out_shape=jax.ShapeDtypeStruct((rows_p, L), jnp.float32),
        grid=(rows_p // tm,),
        in_specs=[
            pl.BlockSpec((tm, L), lambda i: (i, 0)),   # packed x row tile
            pl.BlockSpec((L, L), lambda i: (0, 0)),    # weight (constant index)
            pl.BlockSpec((1, L), lambda i: (0, 0)),    # bias   (constant index)
        ],
        out_specs=pl.BlockSpec((tm, L), lambda i: (i, 0)),
        compiler_params=pltpu.CompilerParams(
            dimension_semantics=("parallel",),
            vmem_limit_bytes=32 * 1024 * 1024,
        ),
    )(xf, w_packed, b_packed)

    # Unpack lanes -> rows (pure reshape), drop padded rows (if any), reshape.
    out = out.reshape(rows_p * P, D)
    if rows_p * P != M:
        out = out[:M]
    return out.reshape(bs, seq, d_k, K)               # (bs, seq, d_k, K)


def _reference(x, weight, bias, u, heads):
    """Plain-JAX reference mirroring the PyTorch forward exactly (f32)."""
    bs, seq, D = x.shape
    d_k = D // heads
    d = int(math.sqrt(d_k))
    h = x @ weight.T + bias                                  # (bs, seq, D)
    h = h.reshape(bs, -1, heads, d_k).transpose(0, 2, 1, 3)  # (bs, K, seq, d_k)
    scores = []
    for i in range(bs):
        hi = jnp.transpose(h[i], (1, 2, 0))                  # (seq, d_k, K)
        scores.append(jnp.exp(hi * u / d))
    return jnp.stack(scores, axis=0)                         # (bs, seq, d_k, K)


if __name__ == "__main__":
    heads = 4
    padded_enc_size = 32   # D
    bs, seq = 2, 8

    key = jax.random.PRNGKey(0)
    kx, kw, kb, ku = jax.random.split(key, 4)

    x = jax.random.normal(kx, (bs, seq, padded_enc_size), dtype=jnp.float32)
    # nn.Linear(D, D) params (deterministic synthetic init).
    weight = jax.random.normal(kw, (padded_enc_size, padded_enc_size),
                               dtype=jnp.float32) * 0.1
    bias = jax.random.normal(kb, (padded_enc_size,), dtype=jnp.float32) * 0.1
    # TODO(synk): U = torch.randn(K) inside the PyTorch forward has no
    # deterministic Pallas equivalent; it is supplied as an explicit input.
    u = jax.random.normal(ku, (heads,), dtype=jnp.float32)

    out = smha_pooling(x, weight, bias, u, heads)
    out = jax.block_until_ready(out)

    ref = _reference(x, weight, bias, u, heads)
    assert out.shape == (bs, seq, padded_enc_size // heads, heads)
    # bf16 MXU operands (f32 accumulate / f32 exp) -> loosened tolerance.
    assert jnp.allclose(out, ref, atol=2e-2, rtol=2e-2)

    print("KERNEL_OK")
</pallas_src>

<mosaic_0001>
module attributes {stable_mosaic.version = 11 : i64} {
  func.func @_smha_kernel(%arg0: i32, %arg1: memref<2x256xf32, #tpu.memory_space<vmem>>, %arg2: memref<256x256xbf16, #tpu.memory_space<vmem>>, %arg3: memref<1x256xf32, #tpu.memory_space<vmem>>, %arg4: memref<2x256xf32, #tpu.memory_space<vmem>>) attributes {dimension_semantics = [#tpu.dimension_semantics<parallel>], iteration_bounds = array<i64: 1>, scalar_prefetch = 0 : i64, scratch_operands = 0 : i64, tpu.core_type = #tpu.core_type<tc>, window_params = [{transform_indices = @transform_0, window_bounds = array<i64: 2, 256>}, {pipeline_mode = #tpu.pipeline_mode<synchronous>, transform_indices = @transform_1, window_bounds = array<i64: 256, 256>}, {pipeline_mode = #tpu.pipeline_mode<synchronous>, transform_indices = @transform_2, window_bounds = array<i64: 1, 256>}, {transform_indices = @transform_3, window_bounds = array<i64: 2, 256>}]} {
    %c0 = arith.constant 0 : index
    %c0_0 = arith.constant 0 : index
    %0 = vector.load %arg1[%c0, %c0_0] : memref<2x256xf32, #tpu.memory_space<vmem>>, vector<2x256xf32>
    %1 = arith.truncf %0 : vector<2x256xf32> to vector<2x256xbf16>
    %c0_1 = arith.constant 0 : index
    %c0_2 = arith.constant 0 : index
    %2 = vector.load %arg2[%c0_1, %c0_2] : memref<256x256xbf16, #tpu.memory_space<vmem>>, vector<256x256xbf16>
    %cst = arith.constant dense<0.000000e+00> : vector<2x256xf32>
    %3 = tpu.matmul %1, %2, %cst {dimension_numbers = #tpu.dot_dimension_numbers<[1], [0], [0], [1], [0, 0, 1, 1], [], []>} : vector<2x256xbf16>, vector<256x256xbf16>, vector<2x256xf32> -> vector<2x256xf32>
    %c0_3 = arith.constant 0 : index
    %c0_4 = arith.constant 0 : index
    %4 = vector.load %arg3[%c0_3, %c0_4] : memref<1x256xf32, #tpu.memory_space<vmem>>, vector<1x256xf32>
    %5 = vector.broadcast %4 : vector<1x256xf32> to vector<2x256xf32>
    %6 = arith.addf %3, %5 : vector<2x256xf32>
    %7 = math.exp %6 : vector<2x256xf32>
    %c0_5 = arith.constant 0 : index
    %c0_6 = arith.constant 0 : index
    %8 = vector.load %arg4[%c0_5, %c0_6] : memref<2x256xf32, #tpu.memory_space<vmem>>, vector<2x256xf32>
    tpu.vector_store %arg4[%c0_5, %c0_6], %7 {strides = array<i32>} : memref<2x256xf32, #tpu.memory_space<vmem>>, vector<2x256xf32>,
    return
  }
  func.func @transform_0(%arg0: i32) -> (i32, i32) {
    %c0_i32 = arith.constant 0 : i32
    %c0_i32_0 = arith.constant 0 : i32
    return %arg0, %c0_i32 : i32, i32
  }
  func.func @transform_1(%arg0: i32) -> (i32, i32) {
    %c0_i32 = arith.constant 0 : i32
    %c0_i32_0 = arith.constant 0 : i32
    %c0_i32_1 = arith.constant 0 : i32
    return %c0_i32, %c0_i32_0 : i32, i32
  }
  func.func @transform_2(%arg0: i32) -> (i32, i32) {
    %c0_i32 = arith.constant 0 : i32
    %c0_i32_0 = arith.constant 0 : i32
    %c0_i32_1 = arith.constant 0 : i32
    return %c0_i32, %c0_i32_0 : i32, i32
  }
  func.func @transform_3(%arg0: i32) -> (i32, i32) {
    %c0_i32 = arith.constant 0 : i32
    %c0_i32_0 = arith.constant 0 : i32
    return %arg0, %c0_i32 : i32, i32
  }
}

</mosaic_0001>

<llo_original>
// kernel: tpu_custom_call.1
$region0: #{tpu_custom_call.1}
  #allocation0 [shape = 'u32[]', space=smem, size = 0x4, offset = 0x4, fixed_abs, tag = 'smem constant byte address 0x4 - core index']
  #allocation1 [shape = 'u32[144,128]{1,0:T(1,128)}', space=vmem, size = 0x12000, scoped, tag = 'internal scratch']
  %s0 = inlined_call_operand.hbm [shape: f32[2,256], index: 0, kind: input, shape index: {}]
  %s1 = inlined_call_operand.hbm [shape: bf16[256,256], index: 1, kind: input, shape index: {}]
  %s2 = inlined_call_operand.vmem [shape: f32[1,256], index: 2, kind: input, shape index: {}]
  %s3 = inlined_call_operand.hbm [shape: f32[2,256], index: 3, kind: output, shape index: {}]
  %s4 = sld [smem:[#allocation0]]
  $region30: #{tpu_custom_call.1} parent=0
    _
  %s6 = ssub.s32 1, %s4
  %s7 = scalar_select 0, %s6, %s4
  $region1: #{tpu_custom_call.1} parent=0
    #allocation2 [shape = 'u8[2048]{0}', space=vmem, size = 0x800, scoped, tag = 'input window, operand 0, single buffered']
    #allocation3 [shape = 's32[1]{0}', space=sflag, size = 0x4, scoped, tag = 'scoped memory for tpu_custom_call.1']
    #allocation4 [shape = 's32[1]{0}', space=sflag, size = 0x4, scoped, tag = 'scoped memory for tpu_custom_call.1']
    #allocation5 [shape = 'u8[131072]{0}', space=vmem, size = 0x20000, scoped, tag = 'input window, operand 1, single buffered']
    #allocation6 [shape = 's32[1]{0}', space=sflag, size = 0x4, scoped, tag = 'scoped memory for tpu_custom_call.1']
    #allocation7 [shape = 'u8[2048]{0}', space=vmem, size = 0x800, scoped, tag = 'output window, operand 0, single buffered']
    %8 = vsyncpa [#allocation3], 0
    %9 = vsyncpa [#allocation6], 0
    %10 = vsyncpa [#allocation4], 0
    // Predicated region
    $region2: #{tpu_custom_call.1} parent=1 // pred_check
      _
    $region3: #{tpu_custom_call.1} parent=1 // pred_check_branch
      %12 = sbr.rel (0) target = $region5
    $region4: #{tpu_custom_call.1} parent=1 // pred_region
      %s14 = ssub.s32 64, 64
      %15 = vsyncadd [#allocation3], %s14
      %s17 = sshll.u32 [#allocation2], 4
      %s18 = int_to_ptr.vmem [resolvable:$true] %s17
      %20 = dma.hbm_to_vmem [thread:$0]  %s0, 64, %s18, [#allocation3]
    $region5: #{tpu_custom_call.1} parent=1 // pred_fallthru
      _
    // Predicated region
    $region6: #{tpu_custom_call.1} parent=1 // pred_check
      _
    $region7: #{tpu_custom_call.1} parent=1 // pred_check_branch
      %22 = sbr.rel (0) target = $region9
    $region8: #{tpu_custom_call.1} parent=1 // pred_region
      %s24 = ssub.s32 4096, 4096
      %25 = vsyncadd [#allocation6], %s24
      %s26 = sshll.u32 [#allocation5], 4
      %s27 = int_to_ptr.vmem [resolvable:$true] %s26
      %32 = dma.hbm_to_vmem [thread:$0]  %s1, 4096, %s27, [#allocation6], 128, 128, 8
    $region9: #{tpu_custom_call.1} parent=1 // pred_fallthru
      _
    // Predicated region
    $region10: #{tpu_custom_call.1} parent=1 // pred_check
      _
    $region11: #{tpu_custom_call.1} parent=1 // pred_check_branch
      %34 = sbr.rel (0) target = $region13
    $region12: #{tpu_custom_call.1} parent=1 // pred_region
      _
    $region13: #{tpu_custom_call.1} parent=1 // pred_fallthru
      _
    // Predicated region
    $region14: #{tpu_custom_call.1} parent=1 // pred_check
      _
    $region15: #{tpu_custom_call.1} parent=1 // pred_check_branch
      %36 = sbr.rel (0) target = $region17
    $region16: #{tpu_custom_call.1} parent=1 // pred_region
      %37 = dma.done [#allocation3], 64
    $region17: #{tpu_custom_call.1} parent=1 // pred_fallthru
      _
    // Predicated region
    $region18: #{tpu_custom_call.1} parent=1 // pred_check
      _
    $region19: #{tpu_custom_call.1} parent=1 // pred_check_branch
      %39 = sbr.rel (0) target = $region21
    $region20: #{tpu_custom_call.1} parent=1 // pred_region
      %40 = dma.done [#allocation6], 4096
    $region21: #{tpu_custom_call.1} parent=1 // pred_fallthru
      _
    %v41 = vld [vmem:[#allocation2] sm:$0xf]
    %v44 = vunpack.c.l.s4 1983009808
    %v45 = vunpack.c.0.s8 %v44
    %v46 = vlaneseq
    %v47 = vshrl.u32 %v46, 7
    %v48 = vsub.s32 %v45, %v47
    %v49 = vrot.slane %v41, %v48
    %v50 = vcombine.high %v49, %v49
    %v53 = vpack.c.bf16 %v49, %v49
    %v54 = vpack.c.bf16 %v50, %v50
    %v55 = vld [vmem:[#allocation5] sm:$0xff]
    %v56 = vld [vmem:[#allocation5 + $0x8] sm:$0xff]
    %v57 = vld [vmem:[#allocation5 + $0x10] sm:$0xff]
    %v58 = vld [vmem:[#allocation5 + $0x18] sm:$0xff]
    %v59 = vld [vmem:[#allocation5 + $0x20] sm:$0xff]
    %v60 = vld [vmem:[#allocation5 + $0x28] sm:$0xff]
    %v61 = vld [vmem:[#allocation5 + $0x30] sm:$0xff]
    %v62 = vld [vmem:[#allocation5 + $0x38] sm:$0xff]
    %v63 = vld [vmem:[#allocation5 + $0x40] sm:$0xff]
    %v64 = vld [vmem:[#allocation5 + $0x48] sm:$0xff]
    %v65 = vld [vmem:[#allocation5 + $0x50] sm:$0xff]
    %v66 = vld [vmem:[#allocation5 + $0x58] sm:$0xff]
    %v67 = vld [vmem:[#allocation5 + $0x60] sm:$0xff]
    %v68 = vld [vmem:[#allocation5 + $0x68] sm:$0xff]
    %v69 = vld [vmem:[#allocation5 + $0x70] sm:$0xff]
    %v70 = vld [vmem:[#allocation5 + $0x78] sm:$0xff]
    %v71 = vld [vmem:[#allocation5 + $0x80] sm:$0xff]
    %v72 = vld [vmem:[#allocation5 + $0x88] sm:$0xff]
    %v73 = vld [vmem:[#allocation5 + $0x90] sm:$0xff]
    %v74 = vld [vmem:[#allocation5 + $0x98] sm:$0xff]
    %v75 = vld [vmem:[#allocation5 + $0xa0] sm:$0xff]
    %v76 = vld [vmem:[#allocation5 + $0xa8] sm:$0xff]
    %v77 = vld [vmem:[#allocation5 + $0xb0] sm:$0xff]
    %v78 = vld [vmem:[#allocation5 + $0xb8] sm:$0xff]
    %v79 = vld [vmem:[#allocation5 + $0xc0] sm:$0xff]
    %v80 = vld [vmem:[#allocation5 + $0xc8] sm:$0xff]
    %v81 = vld [vmem:[#allocation5 + $0xd0] sm:$0xff]
    %v82 = vld [vmem:[#allocation5 + $0xd8] sm:$0xff]
    %v83 = vld [vmem:[#allocation5 + $0xe0] sm:$0xff]
    %v84 = vld [vmem:[#allocation5 + $0xe8] sm:$0xff]
    %v85 = vld [vmem:[#allocation5 + $0xf0] sm:$0xff]
    %v86 = vld [vmem:[#allocation5 + $0xf8] sm:$0xff]
    %v87 = vld [vmem:[%s2] sm:$0x3]
    %v89 = vlaneseq
    %v90 = vshrl.u32 %v89, 7
    %v91 = vsub.s32 0, %v90
    %v92 = vrot.slane %v87, %v91
    %v93 = vlaneseq
    %v94 = vshrl.u32 %v93, 7
    %v95 = vsub.s32 1, %v94
    %v96 = vrot.slane %v87, %v95
    %v131 = vunpack.c.l.b16 %v55
    %v132 = vunpack.c.h.b16 %v55
    %v133 = vunpack.c.l.b16 %v56
    %v134 = vunpack.c.h.b16 %v56
    %v135 = vunpack.c.l.b16 %v57
    %v136 = vunpack.c.h.b16 %v57
    %v137 = vunpack.c.l.b16 %v58
    %v138 = vunpack.c.h.b16 %v58
    %v139 = vunpack.c.l.b16 %v59
    %v140 = vunpack.c.h.b16 %v59
    %v141 = vunpack.c.l.b16 %v60
    %v142 = vunpack.c.h.b16 %v60
    %v143 = vunpack.c.l.b16 %v61
    %v144 = vunpack.c.h.b16 %v61
    %v145 = vunpack.c.l.b16 %v62
    %v146 = vunpack.c.h.b16 %v62
    %v147 = vunpack.c.l.b16 %v63
    %v148 = vunpack.c.h.b16 %v63
    %v149 = vunpack.c.l.b16 %v64
    %v150 = vunpack.c.h.b16 %v64
    %v151 = vunpack.c.l.b16 %v65
    %v152 = vunpack.c.h.b16 %v65
    %v153 = vunpack.c.l.b16 %v66
    %v154 = vunpack.c.h.b16 %v66
    %v155 = vunpack.c.l.b16 %v67
    %v156 = vunpack.c.h.b16 %v67
    %v157 = vunpack.c.l.b16 %v68
    %v158 = vunpack.c.h.b16 %v68
    %v159 = vunpack.c.l.b16 %v69
    %v160 = vunpack.c.h.b16 %v69
    %v161 = vunpack.c.l.b16 %v70
    %v162 = vunpack.c.h.b16 %v70
    %v163 = vunpack.c.l.b16 %v71
    %v164 = vunpack.c.h.b16 %v71
    %v165 = vunpack.c.l.b16 %v72
    %v166 = vunpack.c.h.b16 %v72
    %v167 = vunpack.c.l.b16 %v73
    %v168 = vunpack.c.h.b16 %v73
    %v169 = vunpack.c.l.b16 %v74
    %v170 = vunpack.c.h.b16 %v74
    %v171 = vunpack.c.l.b16 %v75
    %v172 = vunpack.c.h.b16 %v75
    %v173 = vunpack.c.l.b16 %v76
    %v174 = vunpack.c.h.b16 %v76
    %v175 = vunpack.c.l.b16 %v77
    %v176 = vunpack.c.h.b16 %v77
    %v177 = vunpack.c.l.b16 %v78
    %v178 = vunpack.c.h.b16 %v78
    %v179 = vunpack.c.l.b16 %v79
    %v180 = vunpack.c.h.b16 %v79
    %v181 = vunpack.c.l.b16 %v80
    %v182 = vunpack.c.h.b16 %v80
    %v183 = vunpack.c.l.b16 %v81
    %v184 = vunpack.c.h.b16 %v81
    %v185 = vunpack.c.l.b16 %v82
    %v186 = vunpack.c.h.b16 %v82
    %v187 = vunpack.c.l.b16 %v83
    %v188 = vunpack.c.h.b16 %v83
    %v189 = vunpack.c.l.b16 %v84
    %v190 = vunpack.c.h.b16 %v84
    %v191 = vunpack.c.l.b16 %v85
    %v192 = vunpack.c.h.b16 %v85
    %v193 = vunpack.c.l.b16 %v86
    %v194 = vunpack.c.h.b16 %v86
    %v195 = vpack.c.b16 %v133, %v131
    %v196 = vpack.c.b16 %v134, %v132
    %v197 = vpack.c.b16 %v137, %v135
    %v198 = vpack.c.b16 %v138, %v136
    %v199 = vpack.c.b16 %v141, %v139
    %v200 = vpack.c.b16 %v142, %v140
    %v201 = vpack.c.b16 %v145, %v143
    %v202 = vpack.c.b16 %v146, %v144
    %v203 = vpack.c.b16 %v149, %v147
    %v204 = vpack.c.b16 %v150, %v148
    %v205 = vpack.c.b16 %v153, %v151
    %v206 = vpack.c.b16 %v154, %v152
    %v207 = vpack.c.b16 %v157, %v155
    %v208 = vpack.c.b16 %v158, %v156
    %v209 = vpack.c.b16 %v161, %v159
    %v210 = vpack.c.b16 %v162, %v160
    %v211 = vpack.c.b16 %v165, %v163
    %v212 = vpack.c.b16 %v166, %v164
    %v213 = vpack.c.b16 %v169, %v167
    %v214 = vpack.c.b16 %v170, %v168
    %v215 = vpack.c.b16 %v173, %v171
    %v216 = vpack.c.b16 %v174, %v172
    %v217 = vpack.c.b16 %v177, %v175
    %v218 = vpack.c.b16 %v178, %v176
    %v219 = vpack.c.b16 %v181, %v179
    %v220 = vpack.c.b16 %v182, %v180
    %v221 = vpack.c.b16 %v185, %v183
    %v222 = vpack.c.b16 %v186, %v184
    %v223 = vpack.c.b16 %v189, %v187
    %v224 = vpack.c.b16 %v190, %v188
    %v225 = vpack.c.b16 %v193, %v191
    %v226 = vpack.c.b16 %v194, %v192
    %259 = vmatprep.subr.bf16.mxu0 %v196
    %260 = vmatpush1.bf16.msra.mxu0 %v195
    %261 = vmatprep.subr.bf16.mxu0 %v198
    %262 = vmatpush1.bf16.msra.mxu0 %v197
    %263 = vmatprep.subr.bf16.mxu0 %v200
    %264 = vmatpush1.bf16.msra.mxu0 %v199
    %265 = vmatprep.subr.bf16.mxu0 %v202
    %266 = vmatpush1.bf16.msra.mxu0 %v201
    %267 = vmatprep.subr.bf16.mxu0 %v204
    %268 = vmatpush1.bf16.msra.mxu0 %v203
    %269 = vmatprep.subr.bf16.mxu0 %v206
    %270 = vmatpush1.bf16.msra.mxu0 %v205
    %271 = vmatprep.subr.bf16.mxu0 %v208
    %272 = vmatpush1.bf16.msra.mxu0 %v207
    %273 = vmatprep.subr.bf16.mxu0 %v210
    %274 = vmatpush1.bf16.msra.mxu0 %v209
    %275 = vmatprep.subr.bf16.mxu0 %v212
    %276 = vmatpush1.bf16.msra.mxu0 %v211
    %277 = vmatprep.subr.bf16.mxu0 %v214
    %278 = vmatpush1.bf16.msra.mxu0 %v213
    %279 = vmatprep.subr.bf16.mxu0 %v216
    %280 = vmatpush1.bf16.msra.mxu0 %v215
    %281 = vmatprep.subr.bf16.mxu0 %v218
    %282 = vmatpush1.bf16.msra.mxu0 %v217
    %283 = vmatprep.subr.bf16.mxu0 %v220
    %284 = vmatpush1.bf16.msra.mxu0 %v219
    %285 = vmatprep.subr.bf16.mxu0 %v222
    %286 = vmatpush1.bf16.msra.mxu0 %v221
    %287 = vmatprep.subr.bf16.mxu0 %v224
    %288 = vmatpush1.bf16.msra.mxu0 %v223
    %289 = vmatprep.subr.bf16.mxu0 %v226
    %290 = vmatpush1.bf16.msra.mxu0 %v225
    %291 = vmatprep.mubr.bf16.mxu0 %v54
    %292 = vmatmul.mubr.bf16.gmra.mrb[0].mxu0 %v53
    %v293 = vpop.f32.mrb[0].mxu0
    %v294 = vadd.f32 %v92, %v293
    %v295 = vpop.f32.mrb[0].mxu0
    %v296 = vadd.f32 %v96, %v295
    %v297 = vpop.f32.mrb[0].mxu0
    %v298 = vpop.f32.mrb[0].mxu0
    %299 = vdwg.mxu0
    %v300 = vmul.f32 %v294, 1.442695
    %v301 = vpow.pop %v300
    %v302 = vmul.f32 %v296, 1.442695
    %v303 = vpow.pop %v302
    %v306 = vcombine.low %v301, %v303
    %v308 = vunpack.c.l.s4 1983009808
    %v309 = vunpack.c.0.s8 %v308
    %v310 = vlaneseq
    %v311 = vshrl.u32 %v310, 7
    %v312 = vsub.s32 %v309, %v311
    %v313 = vrot.slane %v306, %v312
    %315 = vst [vmem:[#allocation7] sm:$0xf] %v313
    // Predicated region
    $region22: #{tpu_custom_call.1} parent=1 // pred_check
      _
    $region23: #{tpu_custom_call.1} parent=1 // pred_check_branch
      %317 = sbr.rel (0) target = $region25
    $region24: #{tpu_custom_call.1} parent=1 // pred_region
      %s319 = ssub.s32 64, 64
      %320 = vsyncadd [#allocation4], %s319
      %s322 = sshll.u32 [#allocation7], 4
      %s323 = int_to_ptr.vmem [resolvable:$true] %s322
      %325 = dma.vmem_to_hbm [thread:$0]  %s323, 64, %s3, [#allocation4]
    $region25: #{tpu_custom_call.1} parent=1 // pred_fallthru
      _
    // Predicated region
    $region26: #{tpu_custom_call.1} parent=1 // pred_check
      _
    $region27: #{tpu_custom_call.1} parent=1 // pred_check_branch
      %327 = sbr.rel (0) target = $region29
    $region28: #{tpu_custom_call.1} parent=1 // pred_region
      %328 = dma.done [#allocation4], 64
    $region29: #{tpu_custom_call.1} parent=1 // pred_fallthru
      _
    %329 = vsyncpa [#allocation3], 1
    %330 = vsyncpa [#allocation6], 1
    %331 = vsyncpa [#allocation4], 1

</llo_original>
